<compile_context>
chip_gen: v6e
topology: v6e:2x2x1
jax: 0.10.0
libtpu: 0.0.40
codegen_flags: <defaults>
</compile_context>

<pallas_src>
import functools

import jax
import jax.numpy as jnp
from jax.experimental import pallas as pl
from jax.experimental.pallas import tpu as pltpu

_LANE = 128
_SUBLANE = 8
_PER_BUFFER_BYTES = 8 * 1024 * 1024    # per pipeline input buffer (double-buffered)
_VMEM_LIMIT_BYTES = 48 * 1024 * 1024   # <= 64 MiB/TC on v7x; v5e/v6e have 128 MiB


def _dist_loss_kernel(x_ref, o_ref, *, inner, outer, feat, group, packed,
                      valid_rows, tile_rows, n_steps, needs_mask):
    """One grid step: per-row DistLoss summed over this tile, accumulated into o_ref.

    packed=True : x_ref is a (tile_rows, 128) lane-dense view holding `group`
                  original rows of `feat` features per packed row.
    packed=False: x_ref is a (tile_rows, feat) row-major tile (group == 1).
    """
    p = pl.program_id(0)
    s = pl.program_id(1)
    tile_idx = p * n_steps + s

    @pl.when(s == 0)
    def _init():
        o_ref[...] = jnp.zeros_like(o_ref)

    x = x_ref[...].astype(jnp.float32)
    sq = x * x

    if packed:
        # Segmented sum of every `feat`-lane group via an XLU roll+add log-tree
        # (feat is a power of two because feat | 128).  pltpu.roll follows
        # jnp.roll semantics (out[l] = in[(l - shift) % 128]), so after shifts
        # 1, 2, ..., feat/2 lane l holds sum_{j<feat} sq[l - j]; the exact
        # per-row sums therefore sit at the LAST lane of each group
        # (l % feat == feat - 1).  Other lanes hold cross-row windows and are
        # dropped by the lane selector below.
        seg = sq
        shift = 1
        while shift < feat:
            seg = seg + pltpu.roll(seg, shift, axis=1)
            shift *= 2
        norm = jnp.sqrt(seg)
        loss = jnp.abs(jnp.clip(norm, inner, outer) - norm)      # lane-dense
        lane = jax.lax.broadcasted_iota(jnp.int32, (1, _LANE), 1)
        row_sel = (lane % feat) == (feat - 1)                     # one lane / row
    else:
        # Generic fallback (D does not divide 128, or D > 128).
        # TODO(synk): for large non-multiple-of-128 D, a second reduction grid
        # axis over 128-wide D chunks would avoid lane padding; low priority.
        sq_sum = jnp.sum(sq, axis=1, keepdims=True)               # (tile_rows, 1)
        norm = jnp.sqrt(sq_sum)
        loss = jnp.abs(jnp.clip(norm, inner, outer) - norm)
        lane = None
        row_sel = None

    def tile_sum(masked):
        if packed:
            keep = row_sel
            if masked:
                sub = jax.lax.broadcasted_iota(jnp.int32, (tile_rows, _LANE), 0)
                orig_row = (tile_idx * tile_rows + sub) * group + lane // feat
                keep = keep & (orig_row < valid_rows)
            return jnp.sum(jnp.where(keep, loss, 0.0))
        if masked:
            sub = jax.lax.broadcasted_iota(jnp.int32, (tile_rows, 1), 0)
            orig_row = tile_idx * tile_rows + sub
            return jnp.sum(jnp.where(orig_row < valid_rows, loss, 0.0))
        return jnp.sum(loss)

    if needs_mask:
        # Only tiles that actually contain padded/out-of-range rows pay for the
        # row mask; all other steps take the plain-sum path.
        has_pad = (tile_idx + 1) * (tile_rows * group) > valid_rows

        @pl.when(jnp.logical_not(has_pad))
        def _full():
            o_ref[...] += tile_sum(masked=False)

        @pl.when(has_pad)
        def _ragged():
            o_ref[...] += tile_sum(masked=True)
    else:
        o_ref[...] += tile_sum(masked=False)


def dist_loss(point, inner_radius=0.5, outer_radius=2.0, *, max_tile_rows=None):
    """point: (B, D) array. Returns scalar f32 mean DistLoss."""
    B, D = point.shape
    itemsize = jnp.dtype(point.dtype).itemsize

    packed = (D <= _LANE) and (_LANE % D == 0)
    if packed:
        group = _LANE // D
        rows_pad = pl.cdiv(B, group) * group
        x = point
        if rows_pad != B:
            # Rare tail pad (< group rows); padded rows are masked out in-kernel
            # (a zero row would otherwise contribute loss = inner_radius).
            x = jnp.pad(point, ((0, rows_pad - B), (0, 0)))
        x = x.reshape(rows_pad // group, _LANE)        # free row-major reshape
        rows, width = x.shape
    else:
        group = 1
        x = point
        rows, width = B, D

    # Tile rows against the per-buffer VMEM budget (lane-padded width).
    width_padded = pl.cdiv(width, _LANE) * _LANE
    budget_rows = max(_SUBLANE, _PER_BUFFER_BYTES // (width_padded * itemsize))
    if max_tile_rows is not None:                      # test hook / manual override
        budget_rows = min(budget_rows, max_tile_rows)
    if rows <= budget_rows:
        tile_rows = rows                               # full-dim block: always legal
    else:
        tile_rows = max(_SUBLANE, (budget_rows // _SUBLANE) * _SUBLANE)

    n_tiles = pl.cdiv(rows, tile_rows)
    # Always expose a 2-way leading "parallel" axis when there is more than one
    # tile: v7x's two TensorCores each stream half of them; on v5e/v6e (one TC)
    # the extra axis is just a loop and costs nothing.
    if n_tiles >= 2:
        n_parallel, n_steps = 2, pl.cdiv(n_tiles, 2)
    else:
        n_parallel, n_steps = 1, n_tiles
    needs_mask = (n_parallel * n_steps * tile_rows * group) != B

    def in_index_map(p, s):
        # Clamp so tiles past the data (odd tile counts under the 2-way split,
        # ragged last tile) re-read a valid block; their rows are masked out.
        return (jnp.minimum(p * n_steps + s, n_tiles - 1), 0)

    kernel = functools.partial(
        _dist_loss_kernel,
        inner=float(inner_radius),
        outer=float(outer_radius),
        feat=D,
        group=group,
        packed=packed,
        valid_rows=B,
        tile_rows=tile_rows,
        n_steps=n_steps,
        needs_mask=needs_mask,
    )

    partials = pl.pallas_call(
        kernel,
        out_shape=jax.ShapeDtypeStruct((n_parallel, 1, 1), jnp.float32),
        grid_spec=pltpu.PrefetchScalarGridSpec(
            num_scalar_prefetch=0,
            grid=(n_parallel, n_steps),
            in_specs=[pl.BlockSpec((tile_rows, width), in_index_map)],
            out_specs=pl.BlockSpec((1, 1, 1), lambda p, s: (p, 0, 0)),
        ),
        compiler_params=pltpu.CompilerParams(
            dimension_semantics=("parallel", "arbitrary"),
            vmem_limit_bytes=_VMEM_LIMIT_BYTES),
    )(x)

    return jnp.sum(partials) / jnp.float32(B)


def dist_loss_ref(point, inner_radius=0.5, outer_radius=2.0):
    x = point.astype(jnp.float32)
    l2norm = jnp.sqrt(jnp.sum(x * x, axis=1, keepdims=True))
    loss = jnp.abs(jnp.clip(l2norm, inner_radius, outer_radius) - l2norm)
    return jnp.mean(loss)


def _make_points(key, b, d, dtype=jnp.float32):
    # Per-row scales so the norms straddle the [inner, outer] band.
    x = jax.random.normal(key, (b, d), dtype=jnp.float32)
    x = x * jnp.linspace(0.02, 0.6, b, dtype=jnp.float32)[:, None]
    return x.astype(dtype)


if __name__ == "__main__":
    key = jax.random.PRNGKey(0)
    inner_radius, outer_radius = 0.5, 2.0
    k0, k1, k2, k3, k4, k5 = jax.random.split(key, 6)

    # Primary shape: batch=16, feature dim=32 -> packed (4, 128) view, grid (1, 1).
    p0 = _make_points(k0, 16, 32)
    out0 = jax.block_until_ready(dist_loss(p0, inner_radius, outer_radius))
    ref0 = dist_loss_ref(p0, inner_radius, outer_radius)
    assert jnp.allclose(out0, ref0, rtol=1e-5, atol=1e-6), (out0, ref0)

    # Ragged packed-tile count: forced 8-row tiles, 2-way split, gated row mask.
    p1 = _make_points(k1, 40, 32)
    out1 = jax.block_until_ready(
        dist_loss(p1, inner_radius, outer_radius, max_tile_rows=8))
    ref1 = dist_loss_ref(p1, inner_radius, outer_radius)
    assert jnp.allclose(out1, ref1, rtol=1e-5, atol=1e-6), (out1, ref1)

    # Batch not divisible by the packing factor -> wrapper tail pad + row mask.
    p2 = _make_points(k2, 18, 32)
    out2 = jax.block_until_ready(dist_loss(p2, inner_radius, outer_radius))
    ref2 = dist_loss_ref(p2, inner_radius, outer_radius)
    assert jnp.allclose(out2, ref2, rtol=1e-5, atol=1e-6), (out2, ref2)

    # Even tile count -> exact 2-way "parallel" split, no mask branch taken.
    p3 = _make_points(k3, 64, 32)
    out3 = jax.block_until_ready(
        dist_loss(p3, inner_radius, outer_radius, max_tile_rows=8))
    ref3 = dist_loss_ref(p3, inner_radius, outer_radius)
    assert jnp.allclose(out3, ref3, rtol=1e-5, atol=1e-6), (out3, ref3)

    # Generic (non-packed) fallback: D does not divide 128.
    p4 = _make_points(k4, 24, 48)
    out4 = jax.block_until_ready(dist_loss(p4, inner_radius, outer_radius))
    ref4 = dist_loss_ref(p4, inner_radius, outer_radius)
    assert jnp.allclose(out4, ref4, rtol=1e-5, atol=1e-6), (out4, ref4)

    # bf16 inputs stream half the HBM bytes; math is still done in f32 in-kernel.
    p5 = _make_points(k5, 16, 32, dtype=jnp.bfloat16)
    out5 = jax.block_until_ready(dist_loss(p5, inner_radius, outer_radius))
    ref5 = dist_loss_ref(p5, inner_radius, outer_radius)
    assert jnp.allclose(out5, ref5, rtol=1e-3, atol=1e-4), (out5, ref5)

    print("KERNEL_OK")
</pallas_src>

<mosaic_0001>
module attributes {stable_mosaic.version = 11 : i64} {
  func.func @_dist_loss_kernel(%arg0: i32, %arg1: i32, %arg2: memref<4x128xf32, #tpu.memory_space<vmem>>, %arg3: memref<1x1x1xf32, #tpu.memory_space<vmem>>) attributes {dimension_semantics = [#tpu.dimension_semantics<parallel>, #tpu.dimension_semantics<arbitrary>], iteration_bounds = array<i64: 1, 1>, scalar_prefetch = 0 : i64, scratch_operands = 0 : i64, tpu.core_type = #tpu.core_type<tc>, window_params = [{transform_indices = @transform_0, window_bounds = array<i64: 4, 128>}, {transform_indices = @transform_1, window_bounds = array<i64: 1, 1, 1>}]} {
    %c0_i32 = arith.constant 0 : i32
    %0 = arith.cmpi eq, %arg1, %c0_i32 : i32
    %1 = arith.extui %0 : i1 to i32
    %c0_i32_0 = arith.constant 0 : i32
    %2 = arith.cmpi ne, %1, %c0_i32_0 : i32
    scf.if %2 {
      %cst_16 = arith.constant 0.000000e+00 : f32
      %53 = vector.broadcast %cst_16 : f32 to vector<1x1x1xf32>
      %c0_17 = arith.constant 0 : index
      %c0_18 = arith.constant 0 : index
      %c0_19 = arith.constant 0 : index
      %54 = vector.load %arg3[%c0_17, %c0_18, %c0_19] : memref<1x1x1xf32, #tpu.memory_space<vmem>>, vector<1x1x1xf32>
      tpu.vector_store %arg3[%c0_17, %c0_18, %c0_19], %53 {strides = array<i32>} : memref<1x1x1xf32, #tpu.memory_space<vmem>>, vector<1x1x1xf32>,
    } else {
    }
    %c0 = arith.constant 0 : index
    %c0_1 = arith.constant 0 : index
    %3 = vector.load %arg2[%c0, %c0_1] : memref<4x128xf32, #tpu.memory_space<vmem>>, vector<4x128xf32>
    %4 = arith.mulf %3, %3 : vector<4x128xf32>
    %c1_i32 = arith.constant 1 : i32
    %5 = tpu.dynamic_rotate %4 by %c1_i32 dim 1 : vector<4x128xf32>, i32 -> vector<4x128xf32>
    %6 = arith.addf %4, %5 : vector<4x128xf32>
    %c2_i32 = arith.constant 2 : i32
    %7 = tpu.dynamic_rotate %6 by %c2_i32 dim 1 : vector<4x128xf32>, i32 -> vector<4x128xf32>
    %8 = arith.addf %6, %7 : vector<4x128xf32>
    %c4_i32 = arith.constant 4 : i32
    %9 = tpu.dynamic_rotate %8 by %c4_i32 dim 1 : vector<4x128xf32>, i32 -> vector<4x128xf32>
    %10 = arith.addf %8, %9 : vector<4x128xf32>
    %c8_i32 = arith.constant 8 : i32
    %11 = tpu.dynamic_rotate %10 by %c8_i32 dim 1 : vector<4x128xf32>, i32 -> vector<4x128xf32>
    %12 = arith.addf %10, %11 : vector<4x128xf32>
    %c16_i32 = arith.constant 16 : i32
    %13 = tpu.dynamic_rotate %12 by %c16_i32 dim 1 : vector<4x128xf32>, i32 -> vector<4x128xf32>
    %14 = arith.addf %12, %13 : vector<4x128xf32>
    %15 = math.sqrt %14 : vector<4x128xf32>
    %cst = arith.constant 5.000000e-01 : f32
    %cst_2 = arith.constant 2.000000e+00 : f32
    %16 = vector.broadcast %cst : f32 to vector<4x128xf32>
    %17 = arith.maximumf %16, %15 : vector<4x128xf32>
    %18 = vector.broadcast %cst_2 : f32 to vector<4x128xf32>
    %19 = arith.minimumf %18, %17 : vector<4x128xf32>
    %20 = arith.subf %19, %15 : vector<4x128xf32>
    %21 = math.absf %20 : vector<4x128xf32>
    %22 = tpu.iota {dimensions = array<i32: 1>} : vector<1x128xi32>
    %c32_i32 = arith.constant 32 : i32
    %c0_i32_3 = arith.constant 0 : i32
    %23 = arith.cmpi eq, %c32_i32, %c0_i32_3 : i32
    %c1_i32_4 = arith.constant 1 : i32
    %24 = arith.select %23, %c1_i32_4, %c32_i32 : i32
    %25 = vector.broadcast %24 : i32 to vector<1x128xi32>
    %26 = arith.remsi %22, %25 : vector<1x128xi32>
    %c0_i32_5 = arith.constant 0 : i32
    %27 = vector.broadcast %c0_i32_5 : i32 to vector<1x128xi32>
    %28 = arith.cmpi ne, %26, %27 : vector<1x128xi32>
    %c0_i32_6 = arith.constant 0 : i32
    %29 = vector.broadcast %c0_i32_6 : i32 to vector<1x128xi32>
    %30 = arith.cmpi slt, %26, %29 : vector<1x128xi32>
    %c0_i32_7 = arith.constant 0 : i32
    %31 = arith.cmpi slt, %24, %c0_i32_7 : i32
    %32 = vector.broadcast %31 : i1 to vector<1x128xi1>
    %33 = vector.broadcast %32 : vector<1x128xi1> to vector<1x128xi1>
    %34 = arith.xori %30, %33 : vector<1x128xi1>
    %35 = arith.andi %34, %28 : vector<1x128xi1>
    %36 = vector.broadcast %24 : i32 to vector<1x128xi32>
    %37 = arith.addi %26, %36 : vector<1x128xi32>
    %38 = arith.select %35, %37, %26 : vector<1x128xi1>, vector<1x128xi32>
    %c31_i32 = arith.constant 31 : i32
    %39 = vector.broadcast %c31_i32 : i32 to vector<1x128xi32>
    %40 = arith.cmpi eq, %38, %39 : vector<1x128xi32>
    %c0_8 = arith.constant 0 : index
    %c0_9 = arith.constant 0 : index
    %c0_10 = arith.constant 0 : index
    %41 = vector.load %arg3[%c0_8, %c0_9, %c0_10] : memref<1x1x1xf32, #tpu.memory_space<vmem>>, vector<1x1x1xf32>
    %cst_11 = arith.constant 0.000000e+00 : f32
    %42 = vector.shape_cast %40 : vector<1x128xi1> to vector<1x128xi1>
    %43 = vector.broadcast %42 : vector<1x128xi1> to vector<4x128xi1>
    %44 = vector.broadcast %cst_11 : f32 to vector<4x128xf32>
    %45 = arith.select %43, %21, %44 : vector<4x128xi1>, vector<4x128xf32>
    %46 = vector.shape_cast %45 : vector<4x128xf32> to vector<1x4x128xf32>
    %cst_12 = arith.constant dense<0.000000e+00> : vector<1xf32>
    %47 = vector.multi_reduction <add>, %46, %cst_12 [1, 2] : vector<1x4x128xf32> to vector<1xf32>
    %48 = vector.shape_cast %47 : vector<1xf32> to vector<1x1x1xf32>
    %49 = vector.extract %48[0, 0, 0] : f32 from vector<1x1x1xf32>
    %50 = vector.broadcast %49 : f32 to vector<1x1x1xf32>
    %51 = arith.addf %41, %50 : vector<1x1x1xf32>
    %c0_13 = arith.constant 0 : index
    %c0_14 = arith.constant 0 : index
    %c0_15 = arith.constant 0 : index
    %52 = vector.load %arg3[%c0_13, %c0_14, %c0_15] : memref<1x1x1xf32, #tpu.memory_space<vmem>>, vector<1x1x1xf32>
    tpu.vector_store %arg3[%c0_13, %c0_14, %c0_15], %51 {strides = array<i32>} : memref<1x1x1xf32, #tpu.memory_space<vmem>>, vector<1x1x1xf32>,
    return
  }
  func.func @transform_0(%arg0: i32, %arg1: i32) -> (i32, i32) {
    %c1_i32 = arith.constant 1 : i32
    %0 = arith.muli %arg0, %c1_i32 : i32
    %1 = arith.addi %0, %arg1 : i32
    %c0_i32 = arith.constant 0 : i32
    %2 = arith.minsi %1, %c0_i32 : i32
    %c0_i32_0 = arith.constant 0 : i32
    %c0_i32_1 = arith.constant 0 : i32
    return %2, %c0_i32_0 : i32, i32
  }
  func.func @transform_1(%arg0: i32, %arg1: i32) -> (i32, i32, i32) {
    %c0_i32 = arith.constant 0 : i32
    %c0_i32_0 = arith.constant 0 : i32
    %c0_i32_1 = arith.constant 0 : i32
    return %arg0, %c0_i32, %c0_i32_0 : i32, i32, i32
  }
}

</mosaic_0001>

<llo_original>
// kernel: tpu_custom_call.1
$region0: #{tpu_custom_call.1}
  #allocation0 [shape = 'u32[]', space=smem, size = 0x4, offset = 0x4, fixed_abs, tag = 'smem constant byte address 0x4 - core index']
  #allocation1 [shape = 'u32[144,128]{1,0:T(1,128)}', space=vmem, size = 0x12000, scoped, tag = 'internal scratch']
  %s0 = inlined_call_operand.hbm [shape: f32[4,128], index: 0, kind: input, shape index: {}]
  %s1 = inlined_call_operand.hbm [shape: f32[1,1,1], index: 1, kind: output, shape index: {}]
  %s2 = sld [smem:[#allocation0]]
  $region22: #{tpu_custom_call.1} parent=0
    _
  %s4 = ssub.s32 1, %s2
  %s5 = scalar_select 0, %s4, %s2
  $region1: #{tpu_custom_call.1} parent=0
    #allocation2 [shape = 'u8[2048]{0}', space=vmem, size = 0x800, scoped, tag = 'input window, operand 0, single buffered']
    #allocation3 [shape = 's32[1]{0}', space=sflag, size = 0x4, scoped, tag = 'scoped memory for tpu_custom_call.1']
    #allocation4 [shape = 's32[1]{0}', space=sflag, size = 0x4, scoped, tag = 'scoped memory for tpu_custom_call.1']
    #allocation5 [shape = 'u8[512]{0}', space=vmem, size = 0x400, scoped, tag = 'output window, operand 0, single buffered']
    %6 = vsyncpa [#allocation3], 0
    %7 = vsyncpa [#allocation4], 0
    // Predicated region
    $region2: #{tpu_custom_call.1} parent=1 // pred_check
      _
    $region3: #{tpu_custom_call.1} parent=1 // pred_check_branch
      %9 = sbr.rel (0) target = $region5
    $region4: #{tpu_custom_call.1} parent=1 // pred_region
      %s10 = sadd.s32 0, 0
      %p11 = scmp.lt.s32.totalorder %s10, 0
      %s12 = scalar_select %p11, %s10, 0
      %s14 = ssub.s32 64, 64
      %15 = vsyncadd [#allocation3], %s14
      %s16 = smul.addr %s12, 64
      %s17 = scalar_lea.hbm %s0, %s16
      %s19 = sshll.u32 [#allocation2], 4
      %s20 = int_to_ptr.vmem [resolvable:$true] %s19
      %22 = dma.hbm_to_vmem [thread:$0]  %s17, 64, %s20, [#allocation3]
    $region5: #{tpu_custom_call.1} parent=1 // pred_fallthru
      _
    // Predicated region
    $region6: #{tpu_custom_call.1} parent=1 // pred_check
      _
    $region7: #{tpu_custom_call.1} parent=1 // pred_check_branch
      %24 = sbr.rel (0) target = $region9
    $region8: #{tpu_custom_call.1} parent=1 // pred_region
      %25 = dma.done [#allocation3], 64
    $region9: #{tpu_custom_call.1} parent=1 // pred_fallthru
      _
    %s26 = sadd.s32 0, 0
    %p27 = scmp.lt.s32.totalorder %s26, 0
    %s28 = scalar_select %p27, %s26, 0
    %p29 = scmp.eq.s32.totalorder 0, 0
    // Predicated region
    $region10: #{tpu_custom_call.1} parent=1 // pred_check
      %p30 = pneg %p29
    $region11: #{tpu_custom_call.1} parent=1 // pred_check_branch
      %32 = sbr.rel (%p30) target = $region13
    $region12: #{tpu_custom_call.1} parent=1 // pred_region
      %vm33 = vcmask 0
      %34 = vst.msk [vmem:[#allocation5] sm:$0x1] %vm33, 0.0
    $region13: #{tpu_custom_call.1} parent=1 // pred_fallthru
      _
    %v35 = vld [vmem:[#allocation2] sm:$0xf]
    %v36 = vmul.f32 %v35, %v35
    %37 = vrot.lane.b32.xlu0 %v36, 1
    %v38 = vpop.permute.xlu0 %37
    %v39 = vadd.f32 %v36, %v38
    %40 = vrot.lane.b32.xlu0 %v39, 2
    %v41 = vpop.permute.xlu0 %40
    %v42 = vadd.f32 %v39, %v41
    %43 = vrot.lane.b32.xlu0 %v42, 4
    %v44 = vpop.permute.xlu0 %43
    %v45 = vadd.f32 %v42, %v44
    %46 = vrot.lane.b32.xlu0 %v45, 8
    %v47 = vpop.permute.xlu0 %46
    %v48 = vadd.f32 %v45, %v47
    %49 = vrot.lane.b32.xlu0 %v48, 16
    %v50 = vpop.permute.xlu0 %49
    %v51 = vadd.f32 %v48, %v50
    %v52 = vrsqrt.pop %v51
    %v53 = vmul.f32 %v51, %v52
    %vm54 = vcmp.eq.f32.partialorder %v51, inf
    %v55 = vsel %vm54, %v51, %v53
    %vm56 = vcmp.eq.f32.partialorder %v51, 0.0
    %v57 = vand.u32 %v51, 2147483648
    %v58 = vsel %vm56, %v57, %v55
    %v59 = vmax.f32 %v58, 0.5
    %v60 = vmin.f32 %v59, 2.0
    %v61 = vsub.f32 %v60, %v58
    %v62 = vand.u32 2147483647, %v61
    %v63 = vlaneseq
    %v64 = vand.u32 %v63, 127
    %vm65 = vcmp.lt.s32.totalorder %v64, 0
    %v66 = vsub.s32 0, %v64
    %v67 = vsel %vm65, %v66, %v64
    %v68 = vshrl.u32 %v67, 5
    %v69 = vand.u32 %v67, 31
    %v70 = vsub.s32 0, %v69
    %v71 = vsel %vm65, %v70, %v69
    %vm72 = vcmp.ne.s32.totalorder %v71, 0
    %vm73 = vcmp.lt.s32.totalorder %v71, 0
    %vm74 = vmand %vm73, %vm72
    %v75 = vadd.s32 %v71, 32
    %v76 = vsel %vm74, %v75, %v71
    %vm77 = vcmp.eq.s32.totalorder %v76, 31
    %v78 = vld [vmem:[#allocation5] sm:$0x1]
    %v79 = vsel %vm77, 1, 0
    %vm80 = vcmp.eq.s32.totalorder %v79, 1
    %v81 = vsel %vm80, %v62, 0.0
    %vm82 = vcmask 1043456
    %v83 = vsel %vm82, %v81, 0.0
    %84 = vadd.xlane.f32.xlu0 %v83
    %v85 = vpop.xlane.xlu0 %84
    %v86 = vrot.slane %v85, 4
    %v87 = vadd.f32 %v85, %v86
    %v88 = vrot.slane %v87, 2
    %v89 = vadd.f32 %v87, %v88
    %v90 = vrot.slane %v89, 1
    %v91 = vadd.f32 %v89, %v90
    %s92 = vtos %v91
    %v93 = vstv %s92
    %v94 = vadd.f32 %v78, %v93
    %vm95 = vcmask 0
    %96 = vst.msk [vmem:[#allocation5] sm:$0x1] %vm95, %v94
    // Predicated region
    $region14: #{tpu_custom_call.1} parent=1 // pred_check
      _
    $region15: #{tpu_custom_call.1} parent=1 // pred_check_branch
      %98 = sbr.rel (0) target = $region17
    $region16: #{tpu_custom_call.1} parent=1 // pred_region
      %s100 = ssub.s32 16, 16
      %101 = vsyncadd [#allocation4], %s100
      %s103 = sshll.u32 [#allocation5], 4
      %s104 = int_to_ptr.vmem [resolvable:$true] %s103
      %106 = dma.vmem_to_hbm [thread:$0]  %s104, 16, %s1, [#allocation4]
    $region17: #{tpu_custom_call.1} parent=1 // pred_fallthru
      _
    // Predicated region
    $region18: #{tpu_custom_call.1} parent=1 // pred_check
      _
    $region19: #{tpu_custom_call.1} parent=1 // pred_check_branch
      %108 = sbr.rel (0) target = $region21
    $region20: #{tpu_custom_call.1} parent=1 // pred_region
      %109 = dma.done [#allocation4], 16
    $region21: #{tpu_custom_call.1} parent=1 // pred_fallthru
      _
    %110 = vsyncpa [#allocation3], 1
    %111 = vsyncpa [#allocation4], 1

</llo_original>
